<compile_context>
chip_gen: v7x
topology: tpu7x:2x2x1
jax: 0.10.0
libtpu: 0.0.40
codegen_flags: <defaults>
</compile_context>

<pallas_src>
import math
from functools import partial

import jax
import jax.numpy as jnp
from jax.experimental import pallas as pl
from jax.experimental.pallas import tpu as pltpu


def _dsconv_kernel(x_ref, dw_ref, pw_ref, b_ref, o_ref, *, w_pad, l_out):
    """One (batch, row-tile) grid step.

    x_ref : (1, 1, C_in, Lf)  zero-padded, flattened input rows (incl. 1-row halos)
    dw_ref: (9, C_in, 1)      depthwise 3x3 taps (f32), tap index k = di*3 + dj
    pw_ref: (C_out, C_in)     pointwise 1x1 weight (f32)
    b_ref : (C_out, 1)        fused bias  pw @ db + pb  (f32)
    o_ref : (1, 1, C_out, L)  output tile, L = TH * w_pad (multiple of 128)
    """
    # One cast (no-op for f32 inputs), reused by all 9 overlapping tap slices.
    xf = x_ref[0, 0].astype(jnp.float32)                        # (C_in, Lf)

    # ---- depthwise 3x3 (padding=1, groups=C_in): 9 shifted MACs on the VPU ----
    acc = xf[:, 0:l_out] * dw_ref[0]                            # tap (0, 0)
    for k in range(1, 9):
        di, dj = divmod(k, 3)
        off = di * w_pad + dj                                   # static lane offset
        acc = acc + xf[:, off:off + l_out] * dw_ref[k]          # (C_in,1) bcast over lanes

    # ---- pointwise 1x1: MXU matmul (lane-dense N) + fused bias, single down-cast ----
    out = jnp.dot(pw_ref[...], acc, preferred_element_type=jnp.float32)   # (C_out, L)
    o_ref[0, 0] = (out + b_ref[...]).astype(o_ref.dtype)


def depthwise_separable_conv(x, dw, db, pw, pb, *, max_block_bytes=8 * 2**20):
    """x: (B, C_in, H, W); dw: (C_in, 3, 3); db: (C_in,); pw: (C_out, C_in); pb: (C_out,)."""
    B, C_in, H, W = x.shape
    C_out = pw.shape[0]
    assert dw.shape == (C_in, 3, 3) and pw.shape == (C_out, C_in)
    assert db.shape == (C_in,) and pb.shape == (C_out,)
    itemsize = jnp.dtype(x.dtype).itemsize

    # ---- pick the LARGEST row tile TH (divisor of H) whose double-buffered in+out
    #      blocks fit `max_block_bytes` (fewest grid steps, bounded VMEM) ----
    def tile_params(th):
        mult = 128 // math.gcd(th, 128)                   # make th*wp a multiple of 128
        wp = ((W + 2 + mult - 1) // mult) * mult          # padded row stride
        l = th * wp                                       # output lanes (multiple of 128)
        lf = -(-((th + 2) * wp + 2) // 128) * 128         # input lanes (halo + edge, aligned)
        foot = 2 * (C_in * lf + C_out * l) * itemsize     # double-buffered in+out blocks
        return wp, l, lf, foot

    TH = 1
    for th in range(1, H + 1):
        if H % th == 0 and tile_params(th)[3] <= max_block_bytes:
            TH = th
    Wp, L, Lf, _ = tile_params(TH)
    n_th = H // TH

    # ---- wrapper-side layout plumbing (done once): zero-pad, flatten spatial,
    #      materialize overlapping row tiles (1 halo row each side). ----
    xp = jnp.pad(x, ((0, 0), (0, 0), (1, 1), (1, Wp - W - 1)))            # (B,C_in,H+2,Wp)
    xpf = xp.reshape(B, C_in, (H + 2) * Wp)
    tiles = jnp.stack(
        [xpf[:, :, t * TH * Wp:(t * TH + TH + 2) * Wp] for t in range(n_th)], axis=1)
    tiles = jnp.pad(tiles, ((0, 0), (0, 0), (0, 0), (1, Lf - (TH + 2) * Wp - 1)))

    # Weights: reshape / cast / bias-fusion hoisted out of the kernel (done once).
    dw9 = jnp.transpose(dw, (1, 2, 0)).reshape(9, C_in, 1).astype(jnp.float32)
    pw2 = pw.astype(jnp.float32)
    bias = (pw2 @ db.astype(jnp.float32) + pb.astype(jnp.float32)).reshape(C_out, 1)

    # ---- VMEM audit (double-buffered blocks + resident weights) & cost hint ----
    w_bytes = 4 * (dw9.size + pw2.size + bias.size)
    vmem_need = 2 * (C_in * Lf + C_out * L) * itemsize + 2 * w_bytes
    vmem_limit = int(min(64 * 2**20, max(16 * 2**20, 2 * vmem_need)))
    flops = 2 * B * H * W * C_in * (9 + C_out)            # depthwise + pointwise MACs
    bytes_accessed = int(tiles.size * itemsize + B * n_th * C_out * L * itemsize + w_bytes)

    kernel = partial(_dsconv_kernel, w_pad=Wp, l_out=L)
    out_flat = pl.pallas_call(
        kernel,
        out_shape=jax.ShapeDtypeStruct((B, n_th, C_out, L), x.dtype),
        grid_spec=pltpu.PrefetchScalarGridSpec(
            num_scalar_prefetch=0,
            grid=(B, n_th),
            in_specs=[
                pl.BlockSpec((1, 1, C_in, Lf), lambda b, t: (b, t, 0, 0)),  # input rows
                pl.BlockSpec((9, C_in, 1), lambda b, t: (0, 0, 0)),         # dw taps
                pl.BlockSpec((C_out, C_in), lambda b, t: (0, 0)),           # pw weight
                pl.BlockSpec((C_out, 1), lambda b, t: (0, 0)),              # fused bias
            ],
            out_specs=pl.BlockSpec((1, 1, C_out, L), lambda b, t: (b, t, 0, 0)),
        ),
        compiler_params=pltpu.CompilerParams(
            dimension_semantics=("parallel", "parallel"),
            vmem_limit_bytes=vmem_limit),
        cost_estimate=pl.CostEstimate(
            flops=int(flops), transcendentals=0, bytes_accessed=bytes_accessed),
    )(tiles, dw9, pw2, bias)

    # (B, n_th, C_out, TH*Wp) -> drop pad columns, restitch row tiles -> (B, C_out, H, W)
    out = out_flat.reshape(B, n_th, C_out, TH, Wp)[..., 1:W + 1]
    return out.transpose(0, 2, 1, 3, 4).reshape(B, C_out, H, W)


def _reference(x, dw, db, pw, pb):
    """Pure-JAX reference mirroring the PyTorch forward (depthwise 3x3 + pointwise 1x1)."""
    C_in = x.shape[1]
    y = jax.lax.conv_general_dilated(
        x.astype(jnp.float32),
        dw.reshape(C_in, 1, 3, 3).astype(jnp.float32),
        window_strides=(1, 1),
        padding=((1, 1), (1, 1)),
        dimension_numbers=("NCHW", "OIHW", "NCHW"),
        feature_group_count=C_in,
        precision=jax.lax.Precision.HIGHEST)
    y = y + db.reshape(1, C_in, 1, 1)
    out = jnp.einsum("oc,bchw->bohw", pw.astype(jnp.float32), y,
                     precision=jax.lax.Precision.HIGHEST)
    out = out + pb.reshape(1, -1, 1, 1)
    return out.astype(x.dtype)


if __name__ == "__main__":
    key = jax.random.PRNGKey(0)
    kx, kdw, kdb, kpw, kpb = jax.random.split(key, 5)

    # Small shapes consistent with the module.
    B, C_in, C_out, H, W = 2, 8, 16, 32, 32
    x = jax.random.normal(kx, (B, C_in, H, W), dtype=jnp.float32)
    dw = 0.2 * jax.random.normal(kdw, (C_in, 3, 3), dtype=jnp.float32)   # depth_conv.weight (C_in,1,3,3) squeezed
    db = 0.1 * jax.random.normal(kdb, (C_in,), dtype=jnp.float32)        # depth_conv.bias
    pw = 0.2 * jax.random.normal(kpw, (C_out, C_in), dtype=jnp.float32)  # point_conv.weight (C_out,C_in,1,1) squeezed
    pb = 0.1 * jax.random.normal(kpb, (C_out,), dtype=jnp.float32)       # point_conv.bias

    ref = _reference(x, dw, db, pw, pb)

    # Default tiling: one big row tile per batch at this size (grid = (B, 1)).
    out = jax.block_until_ready(jax.jit(depthwise_separable_conv)(x, dw, db, pw, pb))
    assert out.shape == (B, C_out, H, W)
    assert jnp.allclose(out, ref, atol=1e-4, rtol=1e-4), float(jnp.max(jnp.abs(out - ref)))

    # Small-VMEM-budget path: forces multiple halo'd row tiles (exercises the tiled path).
    small = partial(depthwise_separable_conv, max_block_bytes=64 * 1024)
    out2 = jax.block_until_ready(jax.jit(small)(x, dw, db, pw, pb))
    assert jnp.allclose(out2, ref, atol=1e-4, rtol=1e-4), float(jnp.max(jnp.abs(out2 - ref)))

    print("KERNEL_OK")
</pallas_src>

<mosaic_0001>
module attributes {stable_mosaic.version = 11 : i64} {
  func.func @_dsconv_kernel(%arg0: i32, %arg1: i32, %arg2: memref<1x1x8x1280xf32, #tpu.memory_space<vmem>>, %arg3: memref<9x8x1xf32, #tpu.memory_space<vmem>>, %arg4: memref<16x8xf32, #tpu.memory_space<vmem>>, %arg5: memref<16x1xf32, #tpu.memory_space<vmem>>, %arg6: memref<1x1x16x1152xf32, #tpu.memory_space<vmem>>) attributes {dimension_semantics = [#tpu.dimension_semantics<parallel>, #tpu.dimension_semantics<parallel>], iteration_bounds = array<i64: 2, 1>, scalar_prefetch = 0 : i64, scratch_operands = 0 : i64, tpu.core_type = #tpu.core_type<tc>, window_params = [{transform_indices = @transform_0, window_bounds = array<i64: 1, 1, 8, 1280>}, {pipeline_mode = #tpu.pipeline_mode<synchronous>, transform_indices = @transform_1, window_bounds = array<i64: 9, 8, 1>}, {pipeline_mode = #tpu.pipeline_mode<synchronous>, transform_indices = @transform_2, window_bounds = array<i64: 16, 8>}, {pipeline_mode = #tpu.pipeline_mode<synchronous>, transform_indices = @transform_3, window_bounds = array<i64: 16, 1>}, {transform_indices = @transform_4, window_bounds = array<i64: 1, 1, 16, 1152>}]} {
    %c0 = arith.constant 0 : index
    %c0_0 = arith.constant 0 : index
    %c0_1 = arith.constant 0 : index
    %c0_2 = arith.constant 0 : index
    %0 = vector.load %arg2[%c0, %c0_0, %c0_1, %c0_2] : memref<1x1x8x1280xf32, #tpu.memory_space<vmem>>, vector<1x1x8x1280xf32>
    %1 = vector.shape_cast %0 : vector<1x1x8x1280xf32> to vector<8x1280xf32>
    %2 = vector.extract_strided_slice %1 {offsets = [0, 0], sizes = [8, 1152], strides = [1, 1]} : vector<8x1280xf32> to vector<8x1152xf32>
    %c0_3 = arith.constant 0 : index
    %c0_4 = arith.constant 0 : index
    %c0_5 = arith.constant 0 : index
    %3 = vector.load %arg3[%c0_3, %c0_4, %c0_5] : memref<9x8x1xf32, #tpu.memory_space<vmem>>, vector<1x8x1xf32>
    %4 = vector.shape_cast %3 : vector<1x8x1xf32> to vector<8x1xf32>
    %5 = vector.broadcast %4 : vector<8x1xf32> to vector<8x1152xf32>
    %6 = arith.mulf %2, %5 : vector<8x1152xf32>
    %7 = vector.extract_strided_slice %1 {offsets = [0, 1], sizes = [8, 1152], strides = [1, 1]} : vector<8x1280xf32> to vector<8x1152xf32>
    %c1 = arith.constant 1 : index
    %c0_6 = arith.constant 0 : index
    %c0_7 = arith.constant 0 : index
    %8 = vector.load %arg3[%c1, %c0_6, %c0_7] : memref<9x8x1xf32, #tpu.memory_space<vmem>>, vector<1x8x1xf32>
    %9 = vector.shape_cast %8 : vector<1x8x1xf32> to vector<8x1xf32>
    %10 = vector.broadcast %9 : vector<8x1xf32> to vector<8x1152xf32>
    %11 = arith.mulf %7, %10 : vector<8x1152xf32>
    %12 = arith.addf %6, %11 : vector<8x1152xf32>
    %13 = vector.extract_strided_slice %1 {offsets = [0, 2], sizes = [8, 1152], strides = [1, 1]} : vector<8x1280xf32> to vector<8x1152xf32>
    %c2 = arith.constant 2 : index
    %c0_8 = arith.constant 0 : index
    %c0_9 = arith.constant 0 : index
    %14 = vector.load %arg3[%c2, %c0_8, %c0_9] : memref<9x8x1xf32, #tpu.memory_space<vmem>>, vector<1x8x1xf32>
    %15 = vector.shape_cast %14 : vector<1x8x1xf32> to vector<8x1xf32>
    %16 = vector.broadcast %15 : vector<8x1xf32> to vector<8x1152xf32>
    %17 = arith.mulf %13, %16 : vector<8x1152xf32>
    %18 = arith.addf %12, %17 : vector<8x1152xf32>
    %19 = vector.extract_strided_slice %1 {offsets = [0, 36], sizes = [8, 1152], strides = [1, 1]} : vector<8x1280xf32> to vector<8x1152xf32>
    %c3 = arith.constant 3 : index
    %c0_10 = arith.constant 0 : index
    %c0_11 = arith.constant 0 : index
    %20 = vector.load %arg3[%c3, %c0_10, %c0_11] : memref<9x8x1xf32, #tpu.memory_space<vmem>>, vector<1x8x1xf32>
    %21 = vector.shape_cast %20 : vector<1x8x1xf32> to vector<8x1xf32>
    %22 = vector.broadcast %21 : vector<8x1xf32> to vector<8x1152xf32>
    %23 = arith.mulf %19, %22 : vector<8x1152xf32>
    %24 = arith.addf %18, %23 : vector<8x1152xf32>
    %25 = vector.extract_strided_slice %1 {offsets = [0, 37], sizes = [8, 1152], strides = [1, 1]} : vector<8x1280xf32> to vector<8x1152xf32>
    %c4 = arith.constant 4 : index
    %c0_12 = arith.constant 0 : index
    %c0_13 = arith.constant 0 : index
    %26 = vector.load %arg3[%c4, %c0_12, %c0_13] : memref<9x8x1xf32, #tpu.memory_space<vmem>>, vector<1x8x1xf32>
    %27 = vector.shape_cast %26 : vector<1x8x1xf32> to vector<8x1xf32>
    %28 = vector.broadcast %27 : vector<8x1xf32> to vector<8x1152xf32>
    %29 = arith.mulf %25, %28 : vector<8x1152xf32>
    %30 = arith.addf %24, %29 : vector<8x1152xf32>
    %31 = vector.extract_strided_slice %1 {offsets = [0, 38], sizes = [8, 1152], strides = [1, 1]} : vector<8x1280xf32> to vector<8x1152xf32>
    %c5 = arith.constant 5 : index
    %c0_14 = arith.constant 0 : index
    %c0_15 = arith.constant 0 : index
    %32 = vector.load %arg3[%c5, %c0_14, %c0_15] : memref<9x8x1xf32, #tpu.memory_space<vmem>>, vector<1x8x1xf32>
    %33 = vector.shape_cast %32 : vector<1x8x1xf32> to vector<8x1xf32>
    %34 = vector.broadcast %33 : vector<8x1xf32> to vector<8x1152xf32>
    %35 = arith.mulf %31, %34 : vector<8x1152xf32>
    %36 = arith.addf %30, %35 : vector<8x1152xf32>
    %37 = vector.extract_strided_slice %1 {offsets = [0, 72], sizes = [8, 1152], strides = [1, 1]} : vector<8x1280xf32> to vector<8x1152xf32>
    %c6 = arith.constant 6 : index
    %c0_16 = arith.constant 0 : index
    %c0_17 = arith.constant 0 : index
    %38 = vector.load %arg3[%c6, %c0_16, %c0_17] : memref<9x8x1xf32, #tpu.memory_space<vmem>>, vector<1x8x1xf32>
    %39 = vector.shape_cast %38 : vector<1x8x1xf32> to vector<8x1xf32>
    %40 = vector.broadcast %39 : vector<8x1xf32> to vector<8x1152xf32>
    %41 = arith.mulf %37, %40 : vector<8x1152xf32>
    %42 = arith.addf %36, %41 : vector<8x1152xf32>
    %43 = vector.extract_strided_slice %1 {offsets = [0, 73], sizes = [8, 1152], strides = [1, 1]} : vector<8x1280xf32> to vector<8x1152xf32>
    %c7 = arith.constant 7 : index
    %c0_18 = arith.constant 0 : index
    %c0_19 = arith.constant 0 : index
    %44 = vector.load %arg3[%c7, %c0_18, %c0_19] : memref<9x8x1xf32, #tpu.memory_space<vmem>>, vector<1x8x1xf32>
    %45 = vector.shape_cast %44 : vector<1x8x1xf32> to vector<8x1xf32>
    %46 = vector.broadcast %45 : vector<8x1xf32> to vector<8x1152xf32>
    %47 = arith.mulf %43, %46 : vector<8x1152xf32>
    %48 = arith.addf %42, %47 : vector<8x1152xf32>
    %49 = vector.extract_strided_slice %1 {offsets = [0, 74], sizes = [8, 1152], strides = [1, 1]} : vector<8x1280xf32> to vector<8x1152xf32>
    %c8 = arith.constant 8 : index
    %c0_20 = arith.constant 0 : index
    %c0_21 = arith.constant 0 : index
    %50 = vector.load %arg3[%c8, %c0_20, %c0_21] : memref<9x8x1xf32, #tpu.memory_space<vmem>>, vector<1x8x1xf32>
    %51 = vector.shape_cast %50 : vector<1x8x1xf32> to vector<8x1xf32>
    %52 = vector.broadcast %51 : vector<8x1xf32> to vector<8x1152xf32>
    %53 = arith.mulf %49, %52 : vector<8x1152xf32>
    %54 = arith.addf %48, %53 : vector<8x1152xf32>
    %c0_22 = arith.constant 0 : index
    %c0_23 = arith.constant 0 : index
    %55 = vector.load %arg4[%c0_22, %c0_23] : memref<16x8xf32, #tpu.memory_space<vmem>>, vector<16x8xf32>
    %cst = arith.constant dense<0.000000e+00> : vector<16x1152xf32>
    %56 = tpu.matmul %55, %54, %cst {dimension_numbers = #tpu.dot_dimension_numbers<[1], [0], [0], [1], [0, 0, 1, 1], [], []>} : vector<16x8xf32>, vector<8x1152xf32>, vector<16x1152xf32> -> vector<16x1152xf32>
    %c0_24 = arith.constant 0 : index
    %c0_25 = arith.constant 0 : index
    %57 = vector.load %arg5[%c0_24, %c0_25] : memref<16x1xf32, #tpu.memory_space<vmem>>, vector<16x1xf32>
    %58 = vector.broadcast %57 : vector<16x1xf32> to vector<16x1152xf32>
    %59 = arith.addf %56, %58 : vector<16x1152xf32>
    %c0_26 = arith.constant 0 : index
    %c0_27 = arith.constant 0 : index
    %c0_28 = arith.constant 0 : index
    %c0_29 = arith.constant 0 : index
    %60 = vector.load %arg6[%c0_26, %c0_27, %c0_28, %c0_29] : memref<1x1x16x1152xf32, #tpu.memory_space<vmem>>, vector<1x1x16x1152xf32>
    %61 = vector.shape_cast %60 : vector<1x1x16x1152xf32> to vector<16x1152xf32>
    %62 = vector.shape_cast %59 : vector<16x1152xf32> to vector<1x1x16x1152xf32>
    tpu.vector_store %arg6[%c0_26, %c0_27, %c0_28, %c0_29], %62 {strides = array<i32>} : memref<1x1x16x1152xf32, #tpu.memory_space<vmem>>, vector<1x1x16x1152xf32>,
    return
  }
  func.func @transform_0(%arg0: i32, %arg1: i32) -> (i32, i32, i32, i32) {
    %c0_i32 = arith.constant 0 : i32
    %c0_i32_0 = arith.constant 0 : i32
    %c0_i32_1 = arith.constant 0 : i32
    return %arg0, %arg1, %c0_i32, %c0_i32_0 : i32, i32, i32, i32
  }
  func.func @transform_1(%arg0: i32, %arg1: i32) -> (i32, i32, i32) {
    %c0_i32 = arith.constant 0 : i32
    %c0_i32_0 = arith.constant 0 : i32
    %c0_i32_1 = arith.constant 0 : i32
    %c0_i32_2 = arith.constant 0 : i32
    return %c0_i32, %c0_i32_0, %c0_i32_1 : i32, i32, i32
  }
  func.func @transform_2(%arg0: i32, %arg1: i32) -> (i32, i32) {
    %c0_i32 = arith.constant 0 : i32
    %c0_i32_0 = arith.constant 0 : i32
    %c0_i32_1 = arith.constant 0 : i32
    return %c0_i32, %c0_i32_0 : i32, i32
  }
  func.func @transform_3(%arg0: i32, %arg1: i32) -> (i32, i32) {
    %c0_i32 = arith.constant 0 : i32
    %c0_i32_0 = arith.constant 0 : i32
    %c0_i32_1 = arith.constant 0 : i32
    return %c0_i32, %c0_i32_0 : i32, i32
  }
  func.func @transform_4(%arg0: i32, %arg1: i32) -> (i32, i32, i32, i32) {
    %c0_i32 = arith.constant 0 : i32
    %c0_i32_0 = arith.constant 0 : i32
    %c0_i32_1 = arith.constant 0 : i32
    return %arg0, %arg1, %c0_i32, %c0_i32_0 : i32, i32, i32, i32
  }
}

</mosaic_0001>

<llo_original>
// kernel: depthwise_separable_conv.1
$region0: #{depthwise_separable_conv.1}
  #allocation0 [shape = 'u32[]', space=smem, size = 0x4, offset = 0x4, fixed_abs, tag = 'smem constant byte address 0x4 - core index']
  #allocation1 [shape = 'u32[144,128]{1,0:T(1,128)}', space=vmem, size = 0x12000, scoped, tag = 'internal scratch']
  %s0 = inlined_call_operand.vmem [shape: f32[2,1,8,1280], index: 0, kind: input, shape index: {}]
  %s1 = inlined_call_operand.vmem [shape: f32[9,8,1], index: 1, kind: input, shape index: {}]
  %s2 = inlined_call_operand.vmem [shape: f32[16,8], index: 2, kind: input, shape index: {}]
  %s3 = inlined_call_operand.vmem [shape: f32[16,1], index: 3, kind: input, shape index: {}]
  %s4 = inlined_call_operand.vmem [shape: f32[2,1,16,1152], index: 4, kind: output, shape index: {}]
  %s5 = sld [smem:[#allocation0]]
  $region49: #{depthwise_separable_conv.1} parent=0
    _
  %s7 = ssub.s32 1, %s5
  %s8 = scalar_select 0, %s7, %s5
  loop: start=0, step=1, limit=4
  $region2: #{depthwise_separable_conv.1} parent=0 // loop_pre_header
    _
  $region3: #{depthwise_separable_conv.1} parent=0 // loop_header
    %s10 = sphi 0, %s14
    %p11 = scmp.ge.s32.totalorder %s10, 4
    %s17 = sphi 0, %s29
    %s18 = sphi 0, %s25
    %s19 = sphi 0, %s17
    %s20 = sphi 0, %s18
    %s21 = sphi 0, %s19
    %s22 = sphi 0, %s20
    %s34 = sphi 0, %s36
    %s37 = sphi 0, %s34
    %s38 = sphi 0, %s37
    %s54 = sphi 0, %s38
    %s58 = sphi 0, %s58
    %s60 = sphi 0, %s58
    %s61 = sphi 0, %s60
    %s75 = sphi 0, %s61
    %s79 = sphi 0, %s79
    %s81 = sphi 0, %s79
    %s82 = sphi 0, %s81
    %s96 = sphi 0, %s82
    %s100 = sphi 0, %s100
    %s102 = sphi 0, %s100
    %s103 = sphi 0, %s102
    %s117 = sphi 0, %s103
    %s125 = sphi 0, %s127
    %s128 = sphi 0, %s125
    %s129 = sphi 0, %s128
    %s145 = sphi 0, %s129
  $region4: #{depthwise_separable_conv.1} parent=0 // loop_header_branch
    %13 = sbr.rel (%p11) target = $region8
  $region5: #{depthwise_separable_conv.1} parent=0 // loop_body
    %s15 = ssub.s32 %s10, 1
    %s16 = ssub.s32 %s10, 2
    %s23 = sadd.s32 1, %s18
    %p24 = scmp.ge.s32.totalorder %s23, 1
    %s25 = scalar_select %p24, 0, %s23
    %s26 = sadd.s32 1, %s17
    %s27 = scalar_select %p24, %s26, %s17
    %p28 = scmp.ge.s32.totalorder %s27, 2
    %s29 = scalar_select %p28, 0, %s27
    %s30 = ssub.s32 %s17, %s29
    %s31 = ssub.s32 %s18, %s25
    %s32 = sor.u32 %s30, %s31
    %p33 = scmp.eq.s32.totalorder %s32, 0
    %s35 = sadd.s32 %s34, 1
    %s36 = scalar_select %p33, %s34, %s35
    %p39 = pneg %p33
    %p40 = scmp.eq.s32.totalorder %s10, 1
    %p41 = por %p39, %p40
    %p42 = scmp.ne.s32.totalorder %s34, %s37
    %p43 = scmp.eq.s32.totalorder %s10, 0
    %p44 = por %p42, %p43
    %p45 = scmp.ne.s32.totalorder %s34, %s37
    %p46 = scmp.eq.s32.totalorder %s15, 1
    %p47 = por %p45, %p46
    %p48 = scmp.ne.s32.totalorder %s37, %s38
    %p49 = scmp.eq.s32.totalorder %s15, 0
    %p50 = por %p48, %p49
    %p51 = scmp.ne.s32.totalorder %s37, %s38
    %p52 = scmp.eq.s32.totalorder %s16, 1
    %p53 = por %p51, %p52
    %p55 = scmp.ne.s32.totalorder %s38, %s54
    %p56 = scmp.eq.s32.totalorder %s16, 0
    %p57 = por %p55, %p56
    %s59 = sadd.s32 %s58, 1
    %p62 = scmp.eq.s32.totalorder %s10, 1
    %p63 = scmp.ne.s32.totalorder %s58, %s60
    %p64 = scmp.eq.s32.totalorder %s10, 0
    %p65 = por %p63, %p64
    %p66 = scmp.ne.s32.totalorder %s58, %s60
    %p67 = scmp.eq.s32.totalorder %s15, 1
    %p68 = por %p66, %p67
    %p69 = scmp.ne.s32.totalorder %s60, %s61
    %p70 = scmp.eq.s32.totalorder %s15, 0
    %p71 = por %p69, %p70
    %p72 = scmp.ne.s32.totalorder %s60, %s61
    %p73 = scmp.eq.s32.totalorder %s16, 1
    %p74 = por %p72, %p73
    %p76 = scmp.ne.s32.totalorder %s61, %s75
    %p77 = scmp.eq.s32.totalorder %s16, 0
    %p78 = por %p76, %p77
    %s80 = sadd.s32 %s79, 1
    %p83 = scmp.eq.s32.totalorder %s10, 1
    %p84 = scmp.ne.s32.totalorder %s79, %s81
    %p85 = scmp.eq.s32.totalorder %s10, 0
    %p86 = por %p84, %p85
    %p87 = scmp.ne.s32.totalorder %s79, %s81
    %p88 = scmp.eq.s32.totalorder %s15, 1
    %p89 = por %p87, %p88
    %p90 = scmp.ne.s32.totalorder %s81, %s82
    %p91 = scmp.eq.s32.totalorder %s15, 0
    %p92 = por %p90, %p91
    %p93 = scmp.ne.s32.totalorder %s81, %s82
    %p94 = scmp.eq.s32.totalorder %s16, 1
    %p95 = por %p93, %p94
    %p97 = scmp.ne.s32.totalorder %s82, %s96
    %p98 = scmp.eq.s32.totalorder %s16, 0
    %p99 = por %p97, %p98
    %s101 = sadd.s32 %s100, 1
    %p104 = scmp.eq.s32.totalorder %s10, 1
    %p105 = scmp.ne.s32.totalorder %s100, %s102
    %p106 = scmp.eq.s32.totalorder %s10, 0
    %p107 = por %p105, %p106
    %p108 = scmp.ne.s32.totalorder %s100, %s102
    %p109 = scmp.eq.s32.totalorder %s15, 1
    %p110 = por %p108, %p109
    %p111 = scmp.ne.s32.totalorder %s102, %s103
    %p112 = scmp.eq.s32.totalorder %s15, 0
    %p113 = por %p111, %p112
    %p114 = scmp.ne.s32.totalorder %s102, %s103
    %p115 = scmp.eq.s32.totalorder %s16, 1
    %p116 = por %p114, %p115
    %p118 = scmp.ne.s32.totalorder %s103, %s117
    %p119 = scmp.eq.s32.totalorder %s16, 0
    %p120 = por %p118, %p119
    %s121 = ssub.s32 %s17, %s29
    %s122 = ssub.s32 %s18, %s25
    %s123 = sor.u32 %s121, %s122
    %p124 = scmp.eq.s32.totalorder %s123, 0
    %s126 = sadd.s32 %s125, 1
    %s127 = scalar_select %p124, %s125, %s126
    %p130 = pneg %p124
    %p131 = scmp.eq.s32.totalorder %s10, 1
    %p132 = por %p130, %p131
    %p133 = scmp.ne.s32.totalorder %s125, %s128
    %p134 = scmp.eq.s32.totalorder %s10, 0
    %p135 = por %p133, %p134
    %p136 = scmp.ne.s32.totalorder %s125, %s128
    %p137 = scmp.eq.s32.totalorder %s15, 1
    %p138 = por %p136, %p137
    %p139 = scmp.ne.s32.totalorder %s128, %s129
    %p140 = scmp.eq.s32.totalorder %s15, 0
    %p141 = por %p139, %p140
    %p142 = scmp.ne.s32.totalorder %s128, %s129
    %p143 = scmp.eq.s32.totalorder %s16, 1
    %p144 = por %p142, %p143
    %p146 = scmp.ne.s32.totalorder %s129, %s145
    %p147 = scmp.eq.s32.totalorder %s16, 0
    %p148 = por %p146, %p147
    %p149 = scmp.le.s32.totalorder 1, %s10
    %p150 = scmp.lt.s32.totalorder %s10, 3
    %p151 = pnand %p149, %p150
    %p152 = pneg %p151
    // Predicated region
    $region9: #{depthwise_separable_conv.1} parent=5 // pred_check
      _
    $region10: #{depthwise_separable_conv.1} parent=5 // pred_check_branch
      %154 = sbr.rel (%p151) target = $region12
    $region11: #{depthwise_separable_conv.1} parent=5 // pred_region
      %s155 = ssub.s32 %s10, 1
      // Predicated region
      $region13: #{depthwise_separable_conv.1} parent=11 // pred_check
        %p156 = pneg %p71
      $region14: #{depthwise_separable_conv.1} parent=11 // pred_check_branch
        %158 = sbr.rel (%p156) target = $region16
      $region15: #{depthwise_separable_conv.1} parent=11 // pred_region
        _
      $region16: #{depthwise_separable_conv.1} parent=11 // pred_fallthru
        _
      // Predicated region
      $region17: #{depthwise_separable_conv.1} parent=11 // pred_check
        %p159 = pneg %p92
      $region18: #{depthwise_separable_conv.1} parent=11 // pred_check_branch
        %161 = sbr.rel (%p159) target = $region20
      $region19: #{depthwise_separable_conv.1} parent=11 // pred_region
        _
      $region20: #{depthwise_separable_conv.1} parent=11 // pred_fallthru
        _
      // Predicated region
      $region21: #{depthwise_separable_conv.1} parent=11 // pred_check
        %p162 = pneg %p113
      $region22: #{depthwise_separable_conv.1} parent=11 // pred_check_branch
        %164 = sbr.rel (%p162) target = $region24
      $region23: #{depthwise_separable_conv.1} parent=11 // pred_region
        _
      $region24: #{depthwise_separable_conv.1} parent=11 // pred_fallthru
        _
    $region12: #{depthwise_separable_conv.1} parent=5 // pred_fallthru
      _
    %p165 = scmp.lt.s32.totalorder %s10, 2
    // Predicated region
    $region25: #{depthwise_separable_conv.1} parent=5 // pred_check
      %p166 = pneg %p165
    $region26: #{depthwise_separable_conv.1} parent=5 // pred_check_branch
      %168 = sbr.rel (%p166) target = $region28
    $region27: #{depthwise_separable_conv.1} parent=5 // pred_region
      // Predicated region
      $region29: #{depthwise_separable_conv.1} parent=27 // pred_check
        %p169 = pneg %p44
      $region30: #{depthwise_separable_conv.1} parent=27 // pred_check_branch
        %171 = sbr.rel (%p169) target = $region32
      $region31: #{depthwise_separable_conv.1} parent=27 // pred_region
        %p172 = scmp.lt.s32.totalorder %s17, 1
        %s173 = scalar_select %p172, %s17, 1
        %p174 = scmp.lt.s32.totalorder %s18, 0
        %s175 = scalar_select %p174, %s18, 0
        %s176 = smul.addr %s175, 10
        %s177 = smul.addr %s173, 10
        %s178 = sadd.s32 %s176, %s177
        %s179 = smul.addr %s178, 8
        %s180 = scalar_lea.vmem %s0, %s179
      $region32: #{depthwise_separable_conv.1} parent=27 // pred_fallthru
        _
    $region28: #{depthwise_separable_conv.1} parent=5 // pred_fallthru
      _
    %p181 = scmp.le.s32.totalorder 1, %s10
    %p182 = scmp.lt.s32.totalorder %s10, 3
    %p183 = pnand %p181, %p182
    %p184 = pneg %p183
    // Predicated region
    $region33: #{depthwise_separable_conv.1} parent=5 // pred_check
      _
    $region34: #{depthwise_separable_conv.1} parent=5 // pred_check_branch
      %186 = sbr.rel (%p183) target = $region36
    $region35: #{depthwise_separable_conv.1} parent=5 // pred_region
      %s187 = ssub.s32 %s10, 1
      %p188 = scmp.lt.s32.totalorder %s19, 1
      %s189 = scalar_select %p188, %s19, 1
      %p190 = scmp.lt.s32.totalorder %s20, 0
      %s191 = scalar_select %p190, %s20, 0
      %s192 = smul.addr %s191, 10
      %s193 = smul.addr %s189, 10
      %s194 = sadd.s32 %s192, %s193
      %s195 = smul.addr %s194, 8
      %s196 = scalar_lea.vmem %s0, %s195
      %p197 = pneg %p50
      %p198 = pneg %p47
      %p199 = pneg %p71
      %p200 = pneg %p68
      %p201 = pneg %p92
      %p202 = pneg %p89
      %p203 = pneg %p113
      %p204 = pneg %p110
      %p205 = pneg %p141
      %p206 = pneg %p138
      %p207 = scmp.lt.s32.totalorder %s19, 1
      %s208 = scalar_select %p207, %s19, 1
      %p209 = scmp.lt.s32.totalorder %s20, 0
      %s210 = scalar_select %p209, %s20, 0
      %s211 = smul.addr %s210, 18
      %s212 = smul.addr %s208, 18
      %s213 = sadd.s32 %s211, %s212
      %s214 = smul.addr %s213, 8
      %s215 = scalar_lea.vmem %s4, %s214
      %p216 = scmp.lt.s32.totalorder %s19, 1
      %s217 = scalar_select %p216, %s19, 1
      %p218 = scmp.lt.s32.totalorder %s20, 0
      %s219 = scalar_select %p218, %s20, 0
      %s220 = smul.addr %s219, 10
      %s221 = smul.addr %s217, 10
      %s222 = sadd.s32 %s220, %s221
      %s223 = smul.addr %s222, 8
      %s224 = scalar_lea.vmem %s0, %s223
      %p225 = scmp.lt.s32.totalorder %s19, 1
      %s226 = scalar_select %p225, %s19, 1
      %p227 = scmp.lt.s32.totalorder %s20, 0
      %s228 = scalar_select %p227, %s20, 0
      %s229 = smul.addr %s228, 18
      %s230 = smul.addr %s226, 18
      %s231 = sadd.s32 %s229, %s230
      %s232 = smul.addr %s231, 8
      %s233 = scalar_lea.vmem %s4, %s232
      %v234 = vld [vmem:[%s224] sm:$0xff]
      %v235 = vld [vmem:[%s224 + $0x8] sm:$0xff]
      %v236 = vld [vmem:[%s224 + $0x10] sm:$0xff]
      %v237 = vld [vmem:[%s224 + $0x18] sm:$0xff]
      %v238 = vld [vmem:[%s224 + $0x20] sm:$0xff]
      %v239 = vld [vmem:[%s224 + $0x28] sm:$0xff]
      %v240 = vld [vmem:[%s224 + $0x30] sm:$0xff]
      %v241 = vld [vmem:[%s224 + $0x38] sm:$0xff]
      %v242 = vld [vmem:[%s224 + $0x40] sm:$0xff]
      %v243 = vld [vmem:[%s224 + $0x48] sm:$0xff]
      %v244 = vld [vmem:[%s1] sm:$0xff]
      %246 = vset.pattern.permute.xlu0 0
      %247 = vperm.xlu0 %246, %v244
      %v248 = vpop.permute.xlu0 %247
      %v250 = vmul.f32 %v234, %v248
      %v251 = vmul.f32 %v235, %v248
      %v252 = vmul.f32 %v236, %v248
      %v253 = vmul.f32 %v237, %v248
      %v254 = vmul.f32 %v238, %v248
      %v255 = vmul.f32 %v239, %v248
      %v256 = vmul.f32 %v240, %v248
      %v257 = vmul.f32 %v241, %v248
      %v258 = vmul.f32 %v242, %v248
      %s259 = scalar_lea.vmem %s1, 8
      %v260 = vld [vmem:[%s259] sm:$0xff]
      %262 = vset.pattern.permute.xlu0 0
      %263 = vperm.xlu0 %262, %v260
      %v264 = vpop.permute.xlu0 %263
      %v266 = vmul.f32 %v234, %v264
      %v267 = vmul.f32 %v235, %v264
      %v268 = vmul.f32 %v236, %v264
      %v269 = vmul.f32 %v237, %v264
      %v270 = vmul.f32 %v238, %v264
      %v271 = vmul.f32 %v239, %v264
      %v272 = vmul.f32 %v240, %v264
      %v273 = vmul.f32 %v241, %v264
      %v274 = vmul.f32 %v242, %v264
      %v275 = vmul.f32 %v243, %v264
      %286 = vrot.lane.b32.xlu0 %v266, 127
      %v287 = vpop.permute.xlu0 %286
      %288 = vrot.lane.b32.xlu0 %v267, 127
      %v289 = vpop.permute.xlu0 %288
      %290 = vrot.lane.b32.xlu0 %v268, 127
      %v291 = vpop.permute.xlu0 %290
      %292 = vrot.lane.b32.xlu0 %v269, 127
      %v293 = vpop.permute.xlu0 %292
      %294 = vrot.lane.b32.xlu0 %v270, 127
      %v295 = vpop.permute.xlu0 %294
      %296 = vrot.lane.b32.xlu0 %v271, 127
      %v297 = vpop.permute.xlu0 %296
      %298 = vrot.lane.b32.xlu0 %v272, 127
      %v299 = vpop.permute.xlu0 %298
      %300 = vrot.lane.b32.xlu0 %v273, 127
      %v301 = vpop.permute.xlu0 %300
      %302 = vrot.lane.b32.xlu0 %v274, 127
      %v303 = vpop.permute.xlu0 %302
      %304 = vrot.lane.b32.xlu0 %v275, 127
      %v305 = vpop.permute.xlu0 %304
      %vm306 = vcmask 1039360
      %v307 = vsel %vm306, %v287, %v289
      %v308 = vsel %vm306, %v289, %v291
      %v309 = vsel %vm306, %v291, %v293
      %v310 = vsel %vm306, %v293, %v295
      %v311 = vsel %vm306, %v295, %v297
      %v312 = vsel %vm306, %v297, %v299
      %v313 = vsel %vm306, %v299, %v301
      %v314 = vsel %vm306, %v301, %v303
      %v315 = vsel %vm306, %v303, %v305
      %v325 = vadd.f32 %v250, %v307
      %v326 = vadd.f32 %v251, %v308
      %v327 = vadd.f32 %v252, %v309
      %v328 = vadd.f32 %v253, %v310
      %v329 = vadd.f32 %v254, %v311
      %v330 = vadd.f32 %v255, %v312
      %v331 = vadd.f32 %v256, %v313
      %v332 = vadd.f32 %v257, %v314
      %v333 = vadd.f32 %v258, %v315
      %s334 = scalar_lea.vmem %s1, 16
      %v335 = vld [vmem:[%s334] sm:$0xff]
      %337 = vset.pattern.permute.xlu0 0
      %338 = vperm.xlu0 %337, %v335
      %v339 = vpop.permute.xlu0 %338
      %v341 = vmul.f32 %v234, %v339
      %v342 = vmul.f32 %v235, %v339
      %v343 = vmul.f32 %v236, %v339
      %v344 = vmul.f32 %v237, %v339
      %v345 = vmul.f32 %v238, %v339
      %v346 = vmul.f32 %v239, %v339
      %v347 = vmul.f32 %v240, %v339
      %v348 = vmul.f32 %v241, %v339
      %v349 = vmul.f32 %v242, %v339
      %v350 = vmul.f32 %v243, %v339
      %361 = vrot.lane.b32.xlu0 %v341, 126
      %v362 = vpop.permute.xlu0 %361
      %363 = vrot.lane.b32.xlu0 %v342, 126
      %v364 = vpop.permute.xlu0 %363
      %365 = vrot.lane.b32.xlu0 %v343, 126
      %v366 = vpop.permute.xlu0 %365
      %367 = vrot.lane.b32.xlu0 %v344, 126
      %v368 = vpop.permute.xlu0 %367
      %369 = vrot.lane.b32.xlu0 %v345, 126
      %v370 = vpop.permute.xlu0 %369
      %371 = vrot.lane.b32.xlu0 %v346, 126
      %v372 = vpop.permute.xlu0 %371
      %373 = vrot.lane.b32.xlu0 %v347, 126
      %v374 = vpop.permute.xlu0 %373
      %375 = vrot.lane.b32.xlu0 %v348, 126
      %v376 = vpop.permute.xlu0 %375
      %377 = vrot.lane.b32.xlu0 %v349, 126
      %v378 = vpop.permute.xlu0 %377
      %379 = vrot.lane.b32.xlu0 %v350, 126
      %v380 = vpop.permute.xlu0 %379
      %vm381 = vcmask 1031168
      %v382 = vsel %vm381, %v362, %v364
      %v383 = vsel %vm381, %v364, %v366
      %v384 = vsel %vm381, %v366, %v368
      %v385 = vsel %vm381, %v368, %v370
      %v386 = vsel %vm381, %v370, %v372
      %v387 = vsel %vm381, %v372, %v374
      %v388 = vsel %vm381, %v374, %v376
      %v389 = vsel %vm381, %v376, %v378
      %v390 = vsel %vm381, %v378, %v380
      %v400 = vadd.f32 %v325, %v382
      %v401 = vadd.f32 %v326, %v383
      %v402 = vadd.f32 %v327, %v384
      %v403 = vadd.f32 %v328, %v385
      %v404 = vadd.f32 %v329, %v386
      %v405 = vadd.f32 %v330, %v387
      %v406 = vadd.f32 %v331, %v388
      %v407 = vadd.f32 %v332, %v389
      %v408 = vadd.f32 %v333, %v390
      %s409 = scalar_lea.vmem %s1, 24
      %v410 = vld [vmem:[%s409] sm:$0xff]
      %412 = vset.pattern.permute.xlu0 0
      %413 = vperm.xlu0 %412, %v410
      %v414 = vpop.permute.xlu0 %413
      %v416 = vmul.f32 %v234, %v414
      %v417 = vmul.f32 %v235, %v414
      %v418 = vmul.f32 %v236, %v414
      %v419 = vmul.f32 %v237, %v414
      %v420 = vmul.f32 %v238, %v414
      %v421 = vmul.f32 %v239, %v414
      %v422 = vmul.f32 %v240, %v414
      %v423 = vmul.f32 %v241, %v414
      %v424 = vmul.f32 %v242, %v414
      %v425 = vmul.f32 %v243, %v414
      %436 = vrot.lane.b32.xlu0 %v416, 92
      %v437 = vpop.permute.xlu0 %436
      %438 = vrot.lane.b32.xlu0 %v417, 92
      %v439 = vpop.permute.xlu0 %438
      %440 = vrot.lane.b32.xlu0 %v418, 92
      %v441 = vpop.permute.xlu0 %440
      %442 = vrot.lane.b32.xlu0 %v419, 92
      %v443 = vpop.permute.xlu0 %442
      %444 = vrot.lane.b32.xlu0 %v420, 92
      %v445 = vpop.permute.xlu0 %444
      %446 = vrot.lane.b32.xlu0 %v421, 92
      %v447 = vpop.permute.xlu0 %446
      %448 = vrot.lane.b32.xlu0 %v422, 92
      %v449 = vpop.permute.xlu0 %448
      %450 = vrot.lane.b32.xlu0 %v423, 92
      %v451 = vpop.permute.xlu0 %450
      %452 = vrot.lane.b32.xlu0 %v424, 92
      %v453 = vpop.permute.xlu0 %452
      %454 = vrot.lane.b32.xlu0 %v425, 92
      %v455 = vpop.permute.xlu0 %454
      %vm456 = vcmask 752640
      %v457 = vsel %vm456, %v437, %v439
      %v458 = vsel %vm456, %v439, %v441
      %v459 = vsel %vm456, %v441, %v443
      %v460 = vsel %vm456, %v443, %v445
      %v461 = vsel %vm456, %v445, %v447
      %v462 = vsel %vm456, %v447, %v449
      %v463 = vsel %vm456, %v449, %v451
      %v464 = vsel %vm456, %v451, %v453
      %v465 = vsel %vm456, %v453, %v455
      %v475 = vadd.f32 %v400, %v457
      %v476 = vadd.f32 %v401, %v458
      %v477 = vadd.f32 %v402, %v459
      %v478 = vadd.f32 %v403, %v460
      %v479 = vadd.f32 %v404, %v461
      %v480 = vadd.f32 %v405, %v462
      %v481 = vadd.f32 %v406, %v463
      %v482 = vadd.f32 %v407, %v464
      %v483 = vadd.f32 %v408, %v465
      %s484 = scalar_lea.vmem %s1, 32
      %v485 = vld [vmem:[%s484] sm:$0xff]
      %487 = vset.pattern.permute.xlu0 0
      %488 = vperm.xlu0 %487, %v485
      %v489 = vpop.permute.xlu0 %488
      %v491 = vmul.f32 %v234, %v489
      %v492 = vmul.f32 %v235, %v489
      %v493 = vmul.f32 %v236, %v489
      %v494 = vmul.f32 %v237, %v489
      %v495 = vmul.f32 %v238, %v489
      %v496 = vmul.f32 %v239, %v489
      %v497 = vmul.f32 %v240, %v489
      %v498 = vmul.f32 %v241, %v489
      %v499 = vmul.f32 %v242, %v489
      %v500 = vmul.f32 %v243, %v489
      %511 = vrot.lane.b32.xlu0 %v491, 91
      %v512 = vpop.permute.xlu0 %511
      %513 = vrot.lane.b32.xlu0 %v492, 91
      %v514 = vpop.permute.xlu0 %513
      %515 = vrot.lane.b32.xlu0 %v493, 91
      %v516 = vpop.permute.xlu0 %515
      %517 = vrot.lane.b32.xlu0 %v494, 91
      %v518 = vpop.permute.xlu0 %517
      %519 = vrot.lane.b32.xlu0 %v495, 91
      %v520 = vpop.permute.xlu0 %519
      %521 = vrot.lane.b32.xlu0 %v496, 91
      %v522 = vpop.permute.xlu0 %521
      %523 = vrot.lane.b32.xlu0 %v497, 91
      %v524 = vpop.permute.xlu0 %523
      %525 = vrot.lane.b32.xlu0 %v498, 91
      %v526 = vpop.permute.xlu0 %525
      %527 = vrot.lane.b32.xlu0 %v499, 91
      %v528 = vpop.permute.xlu0 %527
      %529 = vrot.lane.b32.xlu0 %v500, 91
      %v530 = vpop.permute.xlu0 %529
      %vm531 = vcmask 744448
      %v532 = vsel %vm531, %v512, %v514
      %v533 = vsel %vm531, %v514, %v516
      %v534 = vsel %vm531, %v516, %v518
      %v535 = vsel %vm531, %v518, %v520
      %v536 = vsel %vm531, %v520, %v522
      %v537 = vsel %vm531, %v522, %v524
      %v538 = vsel %vm531, %v524, %v526
      %v539 = vsel %vm531, %v526, %v528
      %v540 = vsel %vm531, %v528, %v530
      %v550 = vadd.f32 %v475, %v532
      %v551 = vadd.f32 %v476, %v533
      %v552 = vadd.f32 %v477, %v534
      %v553 = vadd.f32 %v478, %v535
      %v554 = vadd.f32 %v479, %v536
      %v555 = vadd.f32 %v480, %v537
      %v556 = vadd.f32 %v481, %v538
      %v557 = vadd.f32 %v482, %v539
      %v558 = vadd.f32 %v483, %v540
      %s559 = scalar_lea.vmem %s1, 40
      %v560 = vld [vmem:[%s559] sm:$0xff]
      %562 = vset.pattern.permute.xlu0 0
      %563 = vperm.xlu0 %562, %v560
      %v564 = vpop.permute.xlu0 %563
      %v566 = vmul.f32 %v234, %v564
      %v567 = vmul.f32 %v235, %v564
      %v568 = vmul.f32 %v236, %v564
      %v569 = vmul.f32 %v237, %v564
      %v570 = vmul.f32 %v238, %v564
      %v571 = vmul.f32 %v239, %v564
      %v572 = vmul.f32 %v240, %v564
      %v573 = vmul.f32 %v241, %v564
      %v574 = vmul.f32 %v242, %v564
      %v575 = vmul.f32 %v243, %v564
      %586 = vrot.lane.b32.xlu0 %v566, 90
      %v587 = vpop.permute.xlu0 %586
      %588 = vrot.lane.b32.xlu0 %v567, 90
      %v589 = vpop.permute.xlu0 %588
      %590 = vrot.lane.b32.xlu0 %v568, 90
      %v591 = vpop.permute.xlu0 %590
      %592 = vrot.lane.b32.xlu0 %v569, 90
      %v593 = vpop.permute.xlu0 %592
      %594 = vrot.lane.b32.xlu0 %v570, 90
      %v595 = vpop.permute.xlu0 %594
      %596 = vrot.lane.b32.xlu0 %v571, 90
      %v597 = vpop.permute.xlu0 %596
      %598 = vrot.lane.b32.xlu0 %v572, 90
      %v599 = vpop.permute.xlu0 %598
      %600 = vrot.lane.b32.xlu0 %v573, 90
      %v601 = vpop.permute.xlu0 %600
      %602 = vrot.lane.b32.xlu0 %v574, 90
      %v603 = vpop.permute.xlu0 %602
      %604 = vrot.lane.b32.xlu0 %v575, 90
      %v605 = vpop.permute.xlu0 %604
      %vm606 = vcmask 736256
      %v607 = vsel %vm606, %v587, %v589
      %v608 = vsel %vm606, %v589, %v591
      %v609 = vsel %vm606, %v591, %v593
      %v610 = vsel %vm606, %v593, %v595
      %v611 = vsel %vm606, %v595, %v597
      %v612 = vsel %vm606, %v597, %v599
      %v613 = vsel %vm606, %v599, %v601
      %v614 = vsel %vm606, %v601, %v603
      %v615 = vsel %vm606, %v603, %v605
      %v625 = vadd.f32 %v550, %v607
      %v626 = vadd.f32 %v551, %v608
      %v627 = vadd.f32 %v552, %v609
      %v628 = vadd.f32 %v553, %v610
      %v629 = vadd.f32 %v554, %v611
      %v630 = vadd.f32 %v555, %v612
      %v631 = vadd.f32 %v556, %v613
      %v632 = vadd.f32 %v557, %v614
      %v633 = vadd.f32 %v558, %v615
      %s634 = scalar_lea.vmem %s1, 48
      %v635 = vld [vmem:[%s634] sm:$0xff]
      %637 = vset.pattern.permute.xlu0 0
      %638 = vperm.xlu0 %637, %v635
      %v639 = vpop.permute.xlu0 %638
      %v641 = vmul.f32 %v234, %v639
      %v642 = vmul.f32 %v235, %v639
      %v643 = vmul.f32 %v236, %v639
      %v644 = vmul.f32 %v237, %v639
      %v645 = vmul.f32 %v238, %v639
      %v646 = vmul.f32 %v239, %v639
      %v647 = vmul.f32 %v240, %v639
      %v648 = vmul.f32 %v241, %v639
      %v649 = vmul.f32 %v242, %v639
      %v650 = vmul.f32 %v243, %v639
      %661 = vrot.lane.b32.xlu0 %v641, 56
      %v662 = vpop.permute.xlu0 %661
      %663 = vrot.lane.b32.xlu0 %v642, 56
      %v664 = vpop.permute.xlu0 %663
      %665 = vrot.lane.b32.xlu0 %v643, 56
      %v666 = vpop.permute.xlu0 %665
      %667 = vrot.lane.b32.xlu0 %v644, 56
      %v668 = vpop.permute.xlu0 %667
      %669 = vrot.lane.b32.xlu0 %v645, 56
      %v670 = vpop.permute.xlu0 %669
      %671 = vrot.lane.b32.xlu0 %v646, 56
      %v672 = vpop.permute.xlu0 %671
      %673 = vrot.lane.b32.xlu0 %v647, 56
      %v674 = vpop.permute.xlu0 %673
      %675 = vrot.lane.b32.xlu0 %v648, 56
      %v676 = vpop.permute.xlu0 %675
      %677 = vrot.lane.b32.xlu0 %v649, 56
      %v678 = vpop.permute.xlu0 %677
      %679 = vrot.lane.b32.xlu0 %v650, 56
      %v680 = vpop.permute.xlu0 %679
      %vm681 = vcmask 457728
      %v682 = vsel %vm681, %v662, %v664
      %v683 = vsel %vm681, %v664, %v666
      %v684 = vsel %vm681, %v666, %v668
      %v685 = vsel %vm681, %v668, %v670
      %v686 = vsel %vm681, %v670, %v672
      %v687 = vsel %vm681, %v672, %v674
      %v688 = vsel %vm681, %v674, %v676
      %v689 = vsel %vm681, %v676, %v678
      %v690 = vsel %vm681, %v678, %v680
      %v700 = vadd.f32 %v625, %v682
      %v701 = vadd.f32 %v626, %v683
      %v702 = vadd.f32 %v627, %v684
      %v703 = vadd.f32 %v628, %v685
      %v704 = vadd.f32 %v629, %v686
      %v705 = vadd.f32 %v630, %v687
      %v706 = vadd.f32 %v631, %v688
      %v707 = vadd.f32 %v632, %v689
      %v708 = vadd.f32 %v633, %v690
      %s709 = scalar_lea.vmem %s1, 56
      %v710 = vld [vmem:[%s709] sm:$0xff]
      %712 = vset.pattern.permute.xlu0 0
      %713 = vperm.xlu0 %712, %v710
      %v714 = vpop.permute.xlu0 %713
      %v716 = vmul.f32 %v234, %v714
      %v717 = vmul.f32 %v235, %v714
      %v718 = vmul.f32 %v236, %v714
      %v719 = vmul.f32 %v237, %v714
      %v720 = vmul.f32 %v238, %v714
      %v721 = vmul.f32 %v239, %v714
      %v722 = vmul.f32 %v240, %v714
      %v723 = vmul.f32 %v241, %v714
      %v724 = vmul.f32 %v242, %v714
      %v725 = vmul.f32 %v243, %v714
      %736 = vrot.lane.b32.xlu0 %v716, 55
      %v737 = vpop.permute.xlu0 %736
      %738 = vrot.lane.b32.xlu0 %v717, 55
      %v739 = vpop.permute.xlu0 %738
      %740 = vrot.lane.b32.xlu0 %v718, 55
      %v741 = vpop.permute.xlu0 %740
      %742 = vrot.lane.b32.xlu0 %v719, 55
      %v743 = vpop.permute.xlu0 %742
      %744 = vrot.lane.b32.xlu0 %v720, 55
      %v745 = vpop.permute.xlu0 %744
      %746 = vrot.lane.b32.xlu0 %v721, 55
      %v747 = vpop.permute.xlu0 %746
      %748 = vrot.lane.b32.xlu0 %v722, 55
      %v749 = vpop.permute.xlu0 %748
      %750 = vrot.lane.b32.xlu0 %v723, 55
      %v751 = vpop.permute.xlu0 %750
      %752 = vrot.lane.b32.xlu0 %v724, 55
      %v753 = vpop.permute.xlu0 %752
      %754 = vrot.lane.b32.xlu0 %v725, 55
      %v755 = vpop.permute.xlu0 %754
      %vm756 = vcmask 449536
      %v757 = vsel %vm756, %v737, %v739
      %v758 = vsel %vm756, %v739, %v741
      %v759 = vsel %vm756, %v741, %v743
      %v760 = vsel %vm756, %v743, %v745
      %v761 = vsel %vm756, %v745, %v747
      %v762 = vsel %vm756, %v747, %v749
      %v763 = vsel %vm756, %v749, %v751
      %v764 = vsel %vm756, %v751, %v753
      %v765 = vsel %vm756, %v753, %v755
      %v775 = vadd.f32 %v700, %v757
      %v776 = vadd.f32 %v701, %v758
      %v777 = vadd.f32 %v702, %v759
      %v778 = vadd.f32 %v703, %v760
      %v779 = vadd.f32 %v704, %v761
      %v780 = vadd.f32 %v705, %v762
      %v781 = vadd.f32 %v706, %v763
      %v782 = vadd.f32 %v707, %v764
      %v783 = vadd.f32 %v708, %v765
      %s784 = scalar_lea.vmem %s1, 64
      %v785 = vld [vmem:[%s784] sm:$0xff]
      %787 = vset.pattern.permute.xlu0 0
      %788 = vperm.xlu0 %787, %v785
      %v789 = vpop.permute.xlu0 %788
      %v791 = vmul.f32 %v234, %v789
      %v792 = vmul.f32 %v235, %v789
      %v793 = vmul.f32 %v236, %v789
      %v794 = vmul.f32 %v237, %v789
      %v795 = vmul.f32 %v238, %v789
      %v796 = vmul.f32 %v239, %v789
      %v797 = vmul.f32 %v240, %v789
      %v798 = vmul.f32 %v241, %v789
      %v799 = vmul.f32 %v242, %v789
      %v800 = vmul.f32 %v243, %v789
      %811 = vrot.lane.b32.xlu0 %v791, 54
      %v812 = vpop.permute.xlu0 %811
      %813 = vrot.lane.b32.xlu0 %v792, 54
      %v814 = vpop.permute.xlu0 %813
      %815 = vrot.lane.b32.xlu0 %v793, 54
      %v816 = vpop.permute.xlu0 %815
      %817 = vrot.lane.b32.xlu0 %v794, 54
      %v818 = vpop.permute.xlu0 %817
      %819 = vrot.lane.b32.xlu0 %v795, 54
      %v820 = vpop.permute.xlu0 %819
      %821 = vrot.lane.b32.xlu0 %v796, 54
      %v822 = vpop.permute.xlu0 %821
      %823 = vrot.lane.b32.xlu0 %v797, 54
      %v824 = vpop.permute.xlu0 %823
      %825 = vrot.lane.b32.xlu0 %v798, 54
      %v826 = vpop.permute.xlu0 %825
      %827 = vrot.lane.b32.xlu0 %v799, 54
      %v828 = vpop.permute.xlu0 %827
      %829 = vrot.lane.b32.xlu0 %v800, 54
      %v830 = vpop.permute.xlu0 %829
      %vm831 = vcmask 441344
      %v832 = vsel %vm831, %v812, %v814
      %v833 = vsel %vm831, %v814, %v816
      %v834 = vsel %vm831, %v816, %v818
      %v835 = vsel %vm831, %v818, %v820
      %v836 = vsel %vm831, %v820, %v822
      %v837 = vsel %vm831, %v822, %v824
      %v838 = vsel %vm831, %v824, %v826
      %v839 = vsel %vm831, %v826, %v828
      %v840 = vsel %vm831, %v828, %v830
      %v850 = vadd.f32 %v775, %v832
      %v851 = vadd.f32 %v776, %v833
      %v852 = vadd.f32 %v777, %v834
      %v853 = vadd.f32 %v778, %v835
      %v854 = vadd.f32 %v779, %v836
      %v855 = vadd.f32 %v780, %v837
      %v856 = vadd.f32 %v781, %v838
      %v857 = vadd.f32 %v782, %v839
      %v858 = vadd.f32 %v783, %v840
      %v859 = vld [vmem:[%s2] sm:$0xff]
      %v860 = vld [vmem:[%s2 + $0x8] sm:$0xff]
      %v861 = vld [vmem:[%s3] sm:$0xff]
      %v862 = vld [vmem:[%s3 + $0x8] sm:$0xff]
      %864 = vset.pattern.permute.xlu0 0
      %865 = vperm.xlu0 %864, %v861
      %v866 = vpop.permute.xlu0 %865
      %869 = vset.pattern.permute.xlu0 0
      %870 = vperm.xlu0 %869, %v862
      %v871 = vpop.permute.xlu0 %870
      %vm873 = vcmask 64512
      %v875 = vsel %vm873, %v859, 0
      %v878 = vsel %vm873, %v860, 0
      %880 = vmatprep.subr.mxu0 %v851
      %881 = vmatpush1.msra.mxu0 %v850
      %882 = vmatprep.subr.mxu0 0.0
      %883 = vmatpush1.msra.mxu0 0.0
      %884 = vmatprep.subr.mxu0 0.0
      %885 = vmatpush1.msra.mxu0 0.0
      %886 = vmatprep.subr.mxu0 0.0
      %887 = vmatpush1.msra.mxu0 0.0
      %888 = vmatprep.subr.mxu0 0.0
      %889 = vmatpush1.msra.mxu0 0.0
      %890 = vmatprep.subr.mxu0 0.0
      %891 = vmatpush1.msra.mxu0 0.0
      %892 = vmatprep.subr.mxu0 0.0
      %893 = vmatpush1.msra.mxu0 0.0
      %894 = vmatprep.subr.mxu0 0.0
      %895 = vmatpush1.msra.mxu0 0.0
      %896 = vmatprep.subr.mxu0 0.0
      %897 = vmatpush1.msra.mxu0 0.0
      %898 = vmatprep.subr.mxu0 0.0
      %899 = vmatpush1.msra.mxu0 0.0
      %900 = vmatprep.subr.mxu0 0.0
      %901 = vmatpush1.msra.mxu0 0.0
      %902 = vmatprep.subr.mxu0 0.0
      %903 = vmatpush1.msra.mxu0 0.0
      %904 = vmatprep.subr.mxu0 0.0
      %905 = vmatpush1.msra.mxu0 0.0
      %906 = vmatprep.subr.mxu0 0.0
      %907 = vmatpush1.msra.mxu0 0.0
      %908 = vmatprep.subr.mxu0 0.0
      %909 = vmatpush1.msra.mxu0 0.0
      %910 = vmatprep.subr.mxu0 0.0
      %911 = vmatpush1.msra.mxu0 0.0
      %912 = vmatprep.subr.mxu0 0.0
      %913 = vmatpush1.msra.mxu0 0.0
      %914 = vmatprep.subr.mxu0 0.0
      %915 = vmatpush1.msra.mxu0 0.0
      %916 = vmatprep.subr.mxu0 0.0
      %917 = vmatpush1.msra.mxu0 0.0
      %918 = vmatprep.subr.mxu0 0.0
      %919 = vmatpush1.msra.mxu0 0.0
      %920 = vmatprep.subr.mxu0 0.0
      %921 = vmatpush1.msra.mxu0 0.0
      %922 = vmatprep.subr.mxu0 0.0
      %923 = vmatpush1.msra.mxu0 0.0
      %924 = vmatprep.subr.mxu0 0.0
      %925 = vmatpush1.msra.mxu0 0.0
      %926 = vmatprep.subr.mxu0 0.0
      %927 = vmatpush1.msra.mxu0 0.0
      %928 = vmatprep.subr.mxu0 0.0
      %929 = vmatpush1.msra.mxu0 0.0
      %930 = vmatprep.subr.mxu0 0.0
      %931 = vmatpush1.msra.mxu0 0.0
      %932 = vmatprep.subr.mxu0 0.0
      %933 = vmatpush1.msra.mxu0 0.0
      %934 = vmatprep.subr.mxu0 0.0
      %935 = vmatpush1.msra.mxu0 0.0
      %936 = vmatprep.subr.mxu0 0.0
      %937 = vmatpush1.msra.mxu0 0.0
      %938 = vmatprep.subr.mxu0 0.0
      %939 = vmatpush1.msra.mxu0 0.0
      %940 = vmatprep.subr.mxu0 0.0
      %941 = vmatpush1.msra.mxu0 0.0
      %942 = vmatprep.subr.mxu0 0.0
      %943 = vmatpush1.msra.mxu0 0.0
      %944 = vmatprep.mubr.f32.mxu0 0.0
      %945 = vmatmul.mubr.f32.gmra.mrb[0].mxu0 %v875
      %v946 = vpop.f32.mrb[0].mxu0
      %v947 = vadd.f32 %v866, %v946
      %v948 = vpop.f32.mrb[0].mxu0
      %v949 = vadd.f32 %v866, %v948
      %950 = vmatprep.mubr.f32.mxu0 0.0
      %951 = vmatmul.mubr.f32.gmra.mrb[0].mxu0 %v878
      %v952 = vpop.f32.mrb[0].mxu0
      %v953 = vadd.f32 %v871, %v952
      %v954 = vpop.f32.mrb[0].mxu0
      %v955 = vadd.f32 %v871, %v954
      %956 = vdwg.mxu0
      %957 = vmatprep.subr.mxu0 %v853
      %958 = vmatpush1.msra.mxu0 %v852
      %959 = vmatprep.subr.mxu0 0.0
      %960 = vmatpush1.msra.mxu0 0.0
      %961 = vmatprep.subr.mxu0 0.0
      %962 = vmatpush1.msra.mxu0 0.0
      %963 = vmatprep.subr.mxu0 0.0
      %964 = vmatpush1.msra.mxu0 0.0
      %965 = vmatprep.subr.mxu0 0.0
      %966 = vmatpush1.msra.mxu0 0.0
      %967 = vmatprep.subr.mxu0 0.0
      %968 = vmatpush1.msra.mxu0 0.0
      %969 = vmatprep.subr.mxu0 0.0
      %970 = vmatpush1.msra.mxu0 0.0
      %971 = vmatprep.subr.mxu0 0.0
      %972 = vmatpush1.msra.mxu0 0.0
      %973 = vmatprep.subr.mxu0 0.0
      %974 = vmatpush1.msra.mxu0 0.0
      %975 = vmatprep.subr.mxu0 0.0
      %976 = vmatpush1.msra.mxu0 0.0
      %977 = vmatprep.subr.mxu0 0.0
      %978 = vmatpush1.msra.mxu0 0.0
      %979 = vmatprep.subr.mxu0 0.0
      %980 = vmatpush1.msra.mxu0 0.0
      %981 = vmatprep.subr.mxu0 0.0
      %982 = vmatpush1.msra.mxu0 0.0
      %983 = vmatprep.subr.mxu0 0.0
      %984 = vmatpush1.msra.mxu0 0.0
      %985 = vmatprep.subr.mxu0 0.0
      %986 = vmatpush1.msra.mxu0 0.0
      %987 = vmatprep.subr.mxu0 0.0
      %988 = vmatpush1.msra.mxu0 0.0
      %989 = vmatprep.subr.mxu0 0.0
      %990 = vmatpush1.msra.mxu0 0.0
      %991 = vmatprep.subr.mxu0 0.0
      %992 = vmatpush1.msra.mxu0 0.0
      %993 = vmatprep.subr.mxu0 0.0
      %994 = vmatpush1.msra.mxu0 0.0
      %995 = vmatprep.subr.mxu0 0.0
      %996 = vmatpush1.msra.mxu0 0.0
      %997 = vmatprep.subr.mxu0 0.0
      %998 = vmatpush1.msra.mxu0 0.0
      %999 = vmatprep.subr.mxu0 0.0
      %1000 = vmatpush1.msra.mxu0 0.0
      %1001 = vmatprep.subr.mxu0 0.0
      %1002 = vmatpush1.msra.mxu0 0.0
      %1003 = vmatprep.subr.mxu0 0.0
      %1004 = vmatpush1.msra.mxu0 0.0
      %1005 = vmatprep.subr.mxu0 0.0
      %1006 = vmatpush1.msra.mxu0 0.0
      %1007 = vmatprep.subr.mxu0 0.0
      %1008 = vmatpush1.msra.mxu0 0.0
      %1009 = vmatprep.subr.mxu0 0.0
      %1010 = vmatpush1.msra.mxu0 0.0
      %1011 = vmatprep.subr.mxu0 0.0
      %1012 = vmatpush1.msra.mxu0 0.0
      %1013 = vmatprep.subr.mxu0 0.0
      %1014 = vmatpush1.msra.mxu0 0.0
      %1015 = vmatprep.subr.mxu0 0.0
      %1016 = vmatpush1.msra.mxu0 0.0
      %1017 = vmatprep.subr.mxu0 0.0
      %1018 = vmatpush1.msra.mxu0 0.0
      %1019 = vmatprep.subr.mxu0 0.0
      %1020 = vmatpush1.msra.mxu0 0.0
      %1021 = vmatprep.mubr.f32.mxu0 0.0
      %1022 = vmatmul.mubr.f32.gmra.mrb[0].mxu0 %v875
      %v1023 = vpop.f32.mrb[0].mxu0
      %v1024 = vadd.f32 %v866, %v1023
      %v1025 = vpop.f32.mrb[0].mxu0
      %v1026 = vadd.f32 %v866, %v1025
      %1027 = vmatprep.mubr.f32.mxu0 0.0
      %1028 = vmatmul.mubr.f32.gmra.mrb[0].mxu0 %v878
      %v1029 = vpop.f32.mrb[0].mxu0
      %v1030 = vadd.f32 %v871, %v1029
      %v1031 = vpop.f32.mrb[0].mxu0
      %v1032 = vadd.f32 %v871, %v1031
      %1033 = vdwg.mxu0
      %1034 = vmatprep.subr.mxu0 %v855
      %1035 = vmatpush1.msra.mxu0 %v854
      %1036 = vmatprep.subr.mxu0 0.0
      %1037 = vmatpush1.msra.mxu0 0.0
      %1038 = vmatprep.subr.mxu0 0.0
      %1039 = vmatpush1.msra.mxu0 0.0
      %1040 = vmatprep.subr.mxu0 0.0
      %1041 = vmatpush1.msra.mxu0 0.0
      %1042 = vmatprep.subr.mxu0 0.0
      %1043 = vmatpush1.msra.mxu0 0.0
      %1044 = vmatprep.subr.mxu0 0.0
      %1045 = vmatpush1.msra.mxu0 0.0
      %1046 = vmatprep.subr.mxu0 0.0
      %1047 = vmatpush1.msra.mxu0 0.0
      %1048 = vmatprep.subr.mxu0 0.0
      %1049 = vmatpush1.msra.mxu0 0.0
      %1050 = vmatprep.subr.mxu0 0.0
      %1051 = vmatpush1.msra.mxu0 0.0
      %1052 = vmatprep.subr.mxu0 0.0
      %1053 = vmatpush1.msra.mxu0 0.0
      %1054 = vmatprep.subr.mxu0 0.0
      %1055 = vmatpush1.msra.mxu0 0.0
      %1056 = vmatprep.subr.mxu0 0.0
      %1057 = vmatpush1.msra.mxu0 0.0
      %1058 = vmatprep.subr.mxu0 0.0
      %1059 = vmatpush1.msra.mxu0 0.0
      %1060 = vmatprep.subr.mxu0 0.0
      %1061 = vmatpush1.msra.mxu0 0.0
      %1062 = vmatprep.subr.mxu0 0.0
      %1063 = vmatpush1.msra.mxu0 0.0
      %1064 = vmatprep.subr.mxu0 0.0
      %1065 = vmatpush1.msra.mxu0 0.0
      %1066 = vmatprep.subr.mxu0 0.0
      %1067 = vmatpush1.msra.mxu0 0.0
      %1068 = vmatprep.subr.mxu0 0.0
      %1069 = vmatpush1.msra.mxu0 0.0
      %1070 = vmatprep.subr.mxu0 0.0
      %1071 = vmatpush1.msra.mxu0 0.0
      %1072 = vmatprep.subr.mxu0 0.0
      %1073 = vmatpush1.msra.mxu0 0.0
      %1074 = vmatprep.subr.mxu0 0.0
      %1075 = vmatpush1.msra.mxu0 0.0
      %1076 = vmatprep.subr.mxu0 0.0
      %1077 = vmatpush1.msra.mxu0 0.0
      %1078 = vmatprep.subr.mxu0 0.0
      %1079 = vmatpush1.msra.mxu0 0.0
      %1080 = vmatprep.subr.mxu0 0.0
      %1081 = vmatpush1.msra.mxu0 0.0
      %1082 = vmatprep.subr.mxu0 0.0
      %1083 = vmatpush1.msra.mxu0 0.0
      %1084 = vmatprep.subr.mxu0 0.0
      %1085 = vmatpush1.msra.mxu0 0.0
      %1086 = vmatprep.subr.mxu0 0.0
      %1087 = vmatpush1.msra.mxu0 0.0
      %1088 = vmatprep.subr.mxu0 0.0
      %1089 = vmatpush1.msra.mxu0 0.0
      %1090 = vmatprep.subr.mxu0 0.0
      %1091 = vmatpush1.msra.mxu0 0.0
      %1092 = vmatprep.subr.mxu0 0.0
      %1093 = vmatpush1.msra.mxu0 0.0
      %1094 = vmatprep.subr.mxu0 0.0
      %1095 = vmatpush1.msra.mxu0 0.0
      %1096 = vmatprep.subr.mxu0 0.0
      %1097 = vmatpush1.msra.mxu0 0.0
      %1098 = vmatprep.mubr.f32.mxu0 0.0
      %1099 = vmatmul.mubr.f32.gmra.mrb[0].mxu0 %v875
      %v1100 = vpop.f32.mrb[0].mxu0
      %v1101 = vadd.f32 %v866, %v1100
      %v1102 = vpop.f32.mrb[0].mxu0
      %v1103 = vadd.f32 %v866, %v1102
      %1104 = vmatprep.mubr.f32.mxu0 0.0
      %1105 = vmatmul.mubr.f32.gmra.mrb[0].mxu0 %v878
      %v1106 = vpop.f32.mrb[0].mxu0
      %v1107 = vadd.f32 %v871, %v1106
      %v1108 = vpop.f32.mrb[0].mxu0
      %v1109 = vadd.f32 %v871, %v1108
      %1110 = vdwg.mxu0
      %1111 = vmatprep.subr.mxu0 %v857
      %1112 = vmatpush1.msra.mxu0 %v856
      %1113 = vmatprep.subr.mxu0 0.0
      %1114 = vmatpush1.msra.mxu0 0.0
      %1115 = vmatprep.subr.mxu0 0.0
      %1116 = vmatpush1.msra.mxu0 0.0
      %1117 = vmatprep.subr.mxu0 0.0
      %1118 = vmatpush1.msra.mxu0 0.0
      %1119 = vmatprep.subr.mxu0 0.0
      %1120 = vmatpush1.msra.mxu0 0.0
      %1121 = vmatprep.subr.mxu0 0.0
      %1122 = vmatpush1.msra.mxu0 0.0
      %1123 = vmatprep.subr.mxu0 0.0
      %1124 = vmatpush1.msra.mxu0 0.0
      %1125 = vmatprep.subr.mxu0 0.0
      %1126 = vmatpush1.msra.mxu0 0.0
      %1127 = vmatprep.subr.mxu0 0.0
      %1128 = vmatpush1.msra.mxu0 0.0
      %1129 = vmatprep.subr.mxu0 0.0
      %1130 = vmatpush1.msra.mxu0 0.0
      %1131 = vmatprep.subr.mxu0 0.0
      %1132 = vmatpush1.msra.mxu0 0.0
      %1133 = vmatprep.subr.mxu0 0.0
      %1134 = vmatpush1.msra.mxu0 0.0
      %1135 = vmatprep.subr.mxu0 0.0
      %1136 = vmatpush1.msra.mxu0 0.0
      %1137 = vmatprep.subr.mxu0 0.0
      %1138 = vmatpush1.msra.mxu0 0.0
      %1139 = vmatprep.subr.mxu0 0.0
      %1140 = vmatpush1.msra.mxu0 0.0
      %1141 = vmatprep.subr.mxu0 0.0
      %1142 = vmatpush1.msra.mxu0 0.0
      %1143 = vmatprep.subr.mxu0 0.0
      %1144 = vmatpush1.msra.mxu0 0.0
      %1145 = vmatprep.subr.mxu0 0.0
      %1146 = vmatpush1.msra.mxu0 0.0
      %1147 = vmatprep.subr.mxu0 0.0
      %1148 = vmatpush1.msra.mxu0 0.0
      %1149 = vmatprep.subr.mxu0 0.0
      %1150 = vmatpush1.msra.mxu0 0.0
      %1151 = vmatprep.subr.mxu0 0.0
      %1152 = vmatpush1.msra.mxu0 0.0
      %1153 = vmatprep.subr.mxu0 0.0
      %1154 = vmatpush1.msra.mxu0 0.0
      %1155 = vmatprep.subr.mxu0 0.0
      %1156 = vmatpush1.msra.mxu0 0.0
      %1157 = vmatprep.subr.mxu0 0.0
      %1158 = vmatpush1.msra.mxu0 0.0
      %1159 = vmatprep.subr.mxu0 0.0
      %1160 = vmatpush1.msra.mxu0 0.0
      %1161 = vmatprep.subr.mxu0 0.0
      %1162 = vmatpush1.msra.mxu0 0.0
      %1163 = vmatprep.subr.mxu0 0.0
      %1164 = vmatpush1.msra.mxu0 0.0
      %1165 = vmatprep.subr.mxu0 0.0
      %1166 = vmatpush1.msra.mxu0 0.0
      %1167 = vmatprep.subr.mxu0 0.0
      %1168 = vmatpush1.msra.mxu0 0.0
      %1169 = vmatprep.subr.mxu0 0.0
      %1170 = vmatpush1.msra.mxu0 0.0
      %1171 = vmatprep.subr.mxu0 0.0
      %1172 = vmatpush1.msra.mxu0 0.0
      %1173 = vmatprep.subr.mxu0 0.0
      %1174 = vmatpush1.msra.mxu0 0.0
      %1175 = vmatprep.mubr.f32.mxu0 0.0
      %1176 = vmatmul.mubr.f32.gmra.mrb[0].mxu0 %v875
      %v1177 = vpop.f32.mrb[0].mxu0
      %v1178 = vadd.f32 %v866, %v1177
      %v1179 = vpop.f32.mrb[0].mxu0
      %v1180 = vadd.f32 %v866, %v1179
      %1181 = vmatprep.mubr.f32.mxu0 0.0
      %1182 = vmatmul.mubr.f32.gmra.mrb[0].mxu0 %v878
      %v1183 = vpop.f32.mrb[0].mxu0
      %v1184 = vadd.f32 %v871, %v1183
      %v1185 = vpop.f32.mrb[0].mxu0
      %v1186 = vadd.f32 %v871, %v1185
      %1187 = vdwg.mxu0
      %1188 = vmatprep.subr.mxu0 0.0
      %1189 = vmatpush1.msra.mxu0 %v858
      %1190 = vmatprep.subr.mxu0 0.0
      %1191 = vmatpush1.msra.mxu0 0.0
      %1192 = vmatprep.subr.mxu0 0.0
      %1193 = vmatpush1.msra.mxu0 0.0
      %1194 = vmatprep.subr.mxu0 0.0
      %1195 = vmatpush1.msra.mxu0 0.0
      %1196 = vmatprep.subr.mxu0 0.0
      %1197 = vmatpush1.msra.mxu0 0.0
      %1198 = vmatprep.subr.mxu0 0.0
      %1199 = vmatpush1.msra.mxu0 0.0
      %1200 = vmatprep.subr.mxu0 0.0
      %1201 = vmatpush1.msra.mxu0 0.0
      %1202 = vmatprep.subr.mxu0 0.0
      %1203 = vmatpush1.msra.mxu0 0.0
      %1204 = vmatprep.subr.mxu0 0.0
      %1205 = vmatpush1.msra.mxu0 0.0
      %1206 = vmatprep.subr.mxu0 0.0
      %1207 = vmatpush1.msra.mxu0 0.0
      %1208 = vmatprep.subr.mxu0 0.0
      %1209 = vmatpush1.msra.mxu0 0.0
      %1210 = vmatprep.subr.mxu0 0.0
      %1211 = vmatpush1.msra.mxu0 0.0
      %1212 = vmatprep.subr.mxu0 0.0
      %1213 = vmatpush1.msra.mxu0 0.0
      %1214 = vmatprep.subr.mxu0 0.0
      %1215 = vmatpush1.msra.mxu0 0.0
      %1216 = vmatprep.subr.mxu0 0.0
      %1217 = vmatpush1.msra.mxu0 0.0
      %1218 = vmatprep.subr.mxu0 0.0
      %1219 = vmatpush1.msra.mxu0 0.0
      %1220 = vmatprep.subr.mxu0 0.0
      %1221 = vmatpush1.msra.mxu0 0.0
      %1222 = vmatprep.subr.mxu0 0.0
      %1223 = vmatpush1.msra.mxu0 0.0
      %1224 = vmatprep.subr.mxu0 0.0
      %1225 = vmatpush1.msra.mxu0 0.0
      %1226 = vmatprep.subr.mxu0 0.0
      %1227 = vmatpush1.msra.mxu0 0.0
      %1228 = vmatprep.subr.mxu0 0.0
      %1229 = vmatpush1.msra.mxu0 0.0
      %1230 = vmatprep.subr.mxu0 0.0
      %1231 = vmatpush1.msra.mxu0 0.0
      %1232 = vmatprep.subr.mxu0 0.0
      %1233 = vmatpush1.msra.mxu0 0.0
      %1234 = vmatprep.subr.mxu0 0.0
      %1235 = vmatpush1.msra.mxu0 0.0
      %1236 = vmatprep.subr.mxu0 0.0
      %1237 = vmatpush1.msra.mxu0 0.0
      %1238 = vmatprep.subr.mxu0 0.0
      %1239 = vmatpush1.msra.mxu0 0.0
      %1240 = vmatprep.subr.mxu0 0.0
      %1241 = vmatpush1.msra.mxu0 0.0
      %1242 = vmatprep.subr.mxu0 0.0
      %1243 = vmatpush1.msra.mxu0 0.0
      %1244 = vmatprep.subr.mxu0 0.0
      %1245 = vmatpush1.msra.mxu0 0.0
      %1246 = vmatprep.subr.mxu0 0.0
      %1247 = vmatpush1.msra.mxu0 0.0
      %1248 = vmatprep.subr.mxu0 0.0
      %1249 = vmatpush1.msra.mxu0 0.0
      %1250 = vmatprep.subr.mxu0 0.0
      %1251 = vmatpush1.msra.mxu0 0.0
      %1252 = vmatprep.mubr.f32.mxu0 0.0
      %1253 = vmatmul.mubr.f32.gmra.mrb[0].mxu0 %v875
      %v1254 = vpop.f32.mrb[0].mxu0
      %v1255 = vadd.f32 %v866, %v1254
      %v1256 = vpop.f32.mrb[0].mxu0
      %1257 = vmatprep.mubr.f32.mxu0 0.0
      %1258 = vmatmul.mubr.f32.gmra.mrb[0].mxu0 %v878
      %v1259 = vpop.f32.mrb[0].mxu0
      %v1260 = vadd.f32 %v871, %v1259
      %v1261 = vpop.f32.mrb[0].mxu0
      %1262 = vdwg.mxu0
      %1263 = vst [vmem:[%s233] sm:$0xff] %v947
      %1264 = vst [vmem:[%s233 + $0x8] sm:$0xff] %v949
      %1265 = vst [vmem:[%s233 + $0x10] sm:$0xff] %v1024
      %1266 = vst [vmem:[%s233 + $0x18] sm:$0xff] %v1026
      %1267 = vst [vmem:[%s233 + $0x20] sm:$0xff] %v1101
      %1268 = vst [vmem:[%s233 + $0x28] sm:$0xff] %v1103
      %1269 = vst [vmem:[%s233 + $0x30] sm:$0xff] %v1178
      %1270 = vst [vmem:[%s233 + $0x38] sm:$0xff] %v1180
      %1271 = vst [vmem:[%s233 + $0x40] sm:$0xff] %v1255
      %1272 = vst [vmem:[%s233 + $0x48] sm:$0xff] %v953
      %1273 = vst [vmem:[%s233 + $0x50] sm:$0xff] %v955
      %1274 = vst [vmem:[%s233 + $0x58] sm:$0xff] %v1030
      %1275 = vst [vmem:[%s233 + $0x60] sm:$0xff] %v1032
      %1276 = vst [vmem:[%s233 + $0x68] sm:$0xff] %v1107
      %1277 = vst [vmem:[%s233 + $0x70] sm:$0xff] %v1109
      %1278 = vst [vmem:[%s233 + $0x78] sm:$0xff] %v1184
      %1279 = vst [vmem:[%s233 + $0x80] sm:$0xff] %v1186
      %1280 = vst [vmem:[%s233 + $0x88] sm:$0xff] %v1260
      %p1281 = scmp.lt.s32.totalorder %s19, 1
      %s1282 = scalar_select %p1281, %s19, 1
      %p1283 = scmp.lt.s32.totalorder %s20, 0
      %s1284 = scalar_select %p1283, %s20, 0
      %s1285 = smul.addr %s1284, 18
      %s1286 = smul.addr %s1282, 18
      %s1287 = sadd.s32 %s1285, %s1286
      %s1288 = smul.addr %s1287, 8
      %s1289 = scalar_lea.vmem %s4, %s1288
      // Predicated region
      $region37: #{depthwise_separable_conv.1} parent=35 // pred_check
        %p1290 = pneg %p138
      $region38: #{depthwise_separable_conv.1} parent=35 // pred_check_branch
        %1292 = sbr.rel (%p1290) target = $region40
      $region39: #{depthwise_separable_conv.1} parent=35 // pred_region
        _
      $region40: #{depthwise_separable_conv.1} parent=35 // pred_fallthru
        _
    $region36: #{depthwise_separable_conv.1} parent=5 // pred_fallthru
      _
    %p1293 = scmp.le.s32.totalorder 2, %s10
    // Predicated region
    $region41: #{depthwise_separable_conv.1} parent=5 // pred_check
      %p1294 = pneg %p1293
    $region42: #{depthwise_separable_conv.1} parent=5 // pred_check_branch
      %1296 = sbr.rel (%p1294) target = $region44
    $region43: #{depthwise_separable_conv.1} parent=5 // pred_region
      %s1297 = ssub.s32 %s10, 2
      // Predicated region
      $region45: #{depthwise_separable_conv.1} parent=43 // pred_check
        %p1298 = pneg %p144
      $region46: #{depthwise_separable_conv.1} parent=43 // pred_check_branch
        %1300 = sbr.rel (%p1298) target = $region48
      $region47: #{depthwise_separable_conv.1} parent=43 // pred_region
        %p1301 = scmp.lt.s32.totalorder %s21, 1
        %s1302 = scalar_select %p1301, %s21, 1
        %p1303 = scmp.lt.s32.totalorder %s22, 0
        %s1304 = scalar_select %p1303, %s22, 0
        %s1305 = smul.addr %s1304, 18
        %s1306 = smul.addr %s1302, 18
        %s1307 = sadd.s32 %s1305, %s1306
        %s1308 = smul.addr %s1307, 8
        %s1309 = scalar_lea.vmem %s4, %s1308
      $region48: #{depthwise_separable_conv.1} parent=43 // pred_fallthru
        _
    $region44: #{depthwise_separable_conv.1} parent=5 // pred_fallthru
      _
  $region6: #{depthwise_separable_conv.1} parent=0 // loop_footer
    %s14 = sadd.s32 1, %s10
  $region7: #{depthwise_separable_conv.1} parent=0 // loop_footer_branch
    %9 = sbr.rel target = $region3
  $region8: #{depthwise_separable_conv.1} parent=0 // loop_exit
    _

</llo_original>
